<compile_context>
chip_gen: v6e
topology: v6e:2x2x1
jax: 0.10.0
libtpu: 0.0.40
codegen_flags: <defaults>
</compile_context>

<pallas_src>
import jax
import jax.numpy as jnp
import numpy as np
from jax.experimental import pallas as pl
from jax.experimental.pallas import tpu as pltpu

EPS = 1e-5


# ----------------------------------------------------------------------------
# Pallas kernel: one batch tile per grid step, everything fused, matmuls only.
# ----------------------------------------------------------------------------
def resblock_kernel(x_ref, w1_ref, b1_ref, m2_ref, s_ref, b2_ref,
                    w3_ref, w4_ref, b34_ref, o_ref):
    mm_dtype = x_ref.dtype                       # f32 or bf16 matmul operands
    x = x_ref[...]                               # (rows, W*Cin)

    # conv1 (1x1, block-diagonal weight) + folded BN1 + ReLU (f32 accumulate).
    h1 = jnp.dot(x, w1_ref[...], preferred_element_type=jnp.float32)
    h1 = jnp.maximum(h1 + b1_ref[...], 0.0)      # (rows, W*Cmid) f32
    h1m = h1.astype(mm_dtype)

    # conv2 (3x3, pad 1): dx taps + W zero-padding live in the banded M2
    # weights; dy = -1/0/+1 row shifts are 0/1 matrices on the MXU.  The
    # S @ h1 results are exact in bf16 (0/1 entries), so the cast is lossless.
    h2 = jnp.dot(h1m, m2_ref[1], preferred_element_type=jnp.float32)       # dy = 0
    up = jnp.dot(s_ref[0], h1m, preferred_element_type=jnp.float32).astype(mm_dtype)
    h2 = h2 + jnp.dot(up, m2_ref[0], preferred_element_type=jnp.float32)   # dy = -1
    dn = jnp.dot(s_ref[1], h1m, preferred_element_type=jnp.float32).astype(mm_dtype)
    h2 = h2 + jnp.dot(dn, m2_ref[2], preferred_element_type=jnp.float32)   # dy = +1
    h2 = jnp.maximum(h2 + b2_ref[...], 0.0)      # (rows, W*Cmid) f32

    # conv3 (1x1) + conv4 (1x1 shortcut): two matmuls summed into one f32
    # result (no operand concat), then shared (b3+b4) bias and final ReLU.
    y = jnp.dot(h2.astype(mm_dtype), w3_ref[...], preferred_element_type=jnp.float32)
    y = y + jnp.dot(x, w4_ref[...], preferred_element_type=jnp.float32)
    y = jnp.maximum(y + b34_ref[...], 0.0)       # (rows, W*Cout) f32

    # Lane-dense store: last dim W*Cout (= 128 in the demo config).
    o_ref[...] = y.astype(o_ref.dtype)


# ----------------------------------------------------------------------------
# Glue: BN folding, structured-weight construction, BlockSpecs, pallas_call.
# ----------------------------------------------------------------------------
def _fold_bn(w_oihw, b, gamma, beta, mean, var):
    """Fold inference-mode BN into conv weight/bias (in f32)."""
    scale = gamma / jnp.sqrt(var + EPS)                    # (O,)
    w_f = w_oihw * scale[:, None, None, None]
    b_f = scale * (b - mean) + beta
    return w_f, b_f


def _auto_config(B):
    """Generation-aware defaults: (batch_tile, matmul_dtype)."""
    try:
        kind = jax.devices()[0].device_kind.lower()
    except Exception:
        kind = ""
    dual_tc = ("v7" in kind) or ("7x" in kind)   # v7x: 2 TensorCores / chip
    if dual_tc and B % 2 == 0:
        batch_tile = B // 2          # keep >= 2 "parallel" grid points (1/core)
    else:
        batch_tile = B               # v5e/v6e: 1 TC -> avoid per-step overhead
    matmul_dtype = jnp.float32 if "v5" in kind else jnp.bfloat16
    return batch_tile, matmul_dtype


def resblock_forward(x_nchw, params, *, matmul_dtype=None, batch_tile=None,
                     out_dtype=jnp.float32):
    B, Cin, H, W = x_nchw.shape
    Cmid = params["conv1_w"].shape[0]
    Cout = params["conv3_w"].shape[0]

    auto_bt, auto_dt = _auto_config(B)
    if batch_tile is None:
        batch_tile = auto_bt
    if matmul_dtype is None:
        matmul_dtype = auto_dt
    assert B % batch_tile == 0

    # Perf contract: unmasked lane-dense stores need W*Cout % 128 == 0 (true
    # for the demo config).  Other shapes remain correct but use masked vst.
    lane_dense = (W * Cout) % 128 == 0  # noqa: F841  (documented contract)

    f32 = jnp.float32
    # Fold each BN into its preceding conv (f32), then build structured mats.
    # In a real deployment these would be precomputed once per checkpoint.
    w1, b1 = _fold_bn(params["conv1_w"], params["conv1_b"], *params["bn1"])
    w2, b2 = _fold_bn(params["conv2_w"], params["conv2_b"], *params["bn2"])
    w3, b3 = _fold_bn(params["conv3_w"], params["conv3_b"], *params["bn3"])
    w4, b4 = _fold_bn(params["conv4_w"], params["conv4_b"], *params["bn4"])

    eye_w = jnp.eye(W, dtype=f32)
    # 1x1 convs as block-diagonal (W*Cprev, W*Cnext) weights: channels mix
    # per pixel, pixels stay put -> activations never leave (rows, W*C).
    w1_bd = jnp.kron(eye_w, w1[:, :, 0, 0].T)              # (W*Cin,  W*Cmid)
    w3_bd = jnp.kron(eye_w, w3[:, :, 0, 0].T)              # (W*Cmid, W*Cout)
    w4_bd = jnp.kron(eye_w, w4[:, :, 0, 0].T)              # (W*Cin,  W*Cout)

    # 3x3 conv: one banded (W*Cmid, W*Cmid) weight per dy carrying the three
    # dx taps; zero padding along W is implicit in the band structure.
    def banded(dy):
        m = jnp.zeros((W * Cmid, W * Cmid), f32)
        for dx in (-1, 0, 1):
            m = m + jnp.kron(jnp.eye(W, k=-dx, dtype=f32),
                             w2[:, :, dy + 1, dx + 1].T)
        return m
    m2_stack = jnp.stack([banded(-1), banded(0), banded(1)])  # (3, WCm, WCm)

    # dy = -1 / +1 row-shift matrices over the (batch_tile*H) row axis; image
    # and batch boundaries are zero rows, so 3x3 zero padding in H is exact.
    eye_b = jnp.eye(batch_tile, dtype=f32)
    s_stack = jnp.stack([jnp.kron(eye_b, jnp.eye(H, k=-1, dtype=f32)),
                         jnp.kron(eye_b, jnp.eye(H, k=+1, dtype=f32))])

    # Biases tiled over W (lane layout (x, c)); stay in f32.
    b1_t = jnp.tile(b1, W).reshape(1, W * Cmid)
    b2_t = jnp.tile(b2, W).reshape(1, W * Cmid)
    b34_t = jnp.tile(b3 + b4, W).reshape(1, W * Cout)

    mm = matmul_dtype
    w1_bd, w3_bd, w4_bd = w1_bd.astype(mm), w3_bd.astype(mm), w4_bd.astype(mm)
    m2_stack, s_stack = m2_stack.astype(mm), s_stack.astype(mm)

    # Boundary layout plumbing: NCHW -> (B*H, W*Cin), channels lane-minor.
    x_rows = jnp.transpose(x_nchw, (0, 2, 3, 1)).reshape(B * H, W * Cin)
    x_rows = x_rows.astype(mm)

    rows_t = batch_tile * H
    full = lambda a: pl.BlockSpec(a.shape, lambda b: (0,) * a.ndim)

    out_rows = pl.pallas_call(
        resblock_kernel,
        out_shape=jax.ShapeDtypeStruct((B * H, W * Cout), out_dtype),
        grid=(B // batch_tile,),
        in_specs=[
            pl.BlockSpec((rows_t, W * Cin), lambda b: (b, 0)),
            full(w1_bd), full(b1_t),
            full(m2_stack), full(s_stack), full(b2_t),
            full(w3_bd), full(w4_bd), full(b34_t),
        ],
        out_specs=pl.BlockSpec((rows_t, W * Cout), lambda b: (b, 0)),
        compiler_params=pltpu.CompilerParams(
            dimension_semantics=("parallel",)),
    )(x_rows, w1_bd, b1_t, m2_stack, s_stack, b2_t, w3_bd, w4_bd, b34_t)

    out_nhwc = out_rows.reshape(B, H, W, Cout)
    return jnp.transpose(out_nhwc, (0, 3, 1, 2))            # back to NCHW


# ----------------------------------------------------------------------------
# Pure-JAX reference (NCHW, lax.conv) for correctness checking.
# ----------------------------------------------------------------------------
def _conv(x, w, b, padding):
    y = jax.lax.conv_general_dilated(
        x, w, window_strides=(1, 1), padding=padding,
        dimension_numbers=("NCHW", "OIHW", "NCHW"))
    return y + b[None, :, None, None]


def _bn(x, gamma, beta, mean, var):
    inv = jax.lax.rsqrt(var + EPS)
    return gamma[None, :, None, None] * (x - mean[None, :, None, None]) * \
        inv[None, :, None, None] + beta[None, :, None, None]


def resblock_reference(x, p):
    relu = lambda t: jnp.maximum(t, 0.0)
    x_ = relu(_bn(_conv(x, p["conv1_w"], p["conv1_b"], "VALID"), *p["bn1"]))
    x_ = relu(_bn(_conv(x_, p["conv2_w"], p["conv2_b"], ((1, 1), (1, 1))), *p["bn2"]))
    br = _bn(_conv(x_, p["conv3_w"], p["conv3_b"], "VALID"), *p["bn3"])
    sc = _bn(_conv(x, p["conv4_w"], p["conv4_b"], "VALID"), *p["bn4"])
    return relu(sc + br)


# ----------------------------------------------------------------------------
def make_params(key, in_c, ratio=4):
    cm, co = in_c // ratio, in_c // 2
    ks = jax.random.split(key, 16)
    f32 = jnp.float32

    def bn_params(k, c):
        k1, k2, k3, k4 = jax.random.split(k, 4)
        return (jax.random.uniform(k1, (c,), f32, 0.5, 1.5),   # gamma
                0.1 * jax.random.normal(k2, (c,), f32),        # beta
                0.1 * jax.random.normal(k3, (c,), f32),        # running_mean
                jax.random.uniform(k4, (c,), f32, 0.5, 1.5))   # running_var

    return {
        "conv1_w": 0.1 * jax.random.normal(ks[0], (cm, in_c, 1, 1), f32),
        "conv1_b": 0.1 * jax.random.normal(ks[1], (cm,), f32),
        "bn1": bn_params(ks[2], cm),
        "conv2_w": 0.1 * jax.random.normal(ks[3], (cm, cm, 3, 3), f32),
        "conv2_b": 0.1 * jax.random.normal(ks[4], (cm,), f32),
        "bn2": bn_params(ks[5], cm),
        "conv3_w": 0.1 * jax.random.normal(ks[6], (co, cm, 1, 1), f32),
        "conv3_b": 0.1 * jax.random.normal(ks[7], (co,), f32),
        "bn3": bn_params(ks[8], co),
        "conv4_w": 0.1 * jax.random.normal(ks[9], (co, in_c, 1, 1), f32),
        "conv4_b": 0.1 * jax.random.normal(ks[10], (co,), f32),
        "bn4": bn_params(ks[11], co),
    }


if __name__ == "__main__":
    key = jax.random.PRNGKey(0)
    kx, kp = jax.random.split(key)

    B, in_c, H, W = 2, 16, 16, 16          # in_c=16 -> mid=4, out=8; W*Cout=128
    x = jax.random.normal(kx, (B, in_c, H, W), jnp.float32)
    params = make_params(kp, in_c, ratio=4)

    ref = jax.block_until_ready(resblock_reference(x, params))

    # f32 matmul operands (v5e default), tight tolerance.
    out_f32 = jax.block_until_ready(
        resblock_forward(x, params, matmul_dtype=jnp.float32))
    np.testing.assert_allclose(np.asarray(out_f32), np.asarray(ref),
                               rtol=1e-4, atol=1e-4)

    # bf16 matmul operands (native MXU input on v6e/v7x), looser tolerance.
    out_bf16 = jax.block_until_ready(
        resblock_forward(x, params, matmul_dtype=jnp.bfloat16))
    np.testing.assert_allclose(np.asarray(out_bf16), np.asarray(ref),
                               rtol=5e-2, atol=5e-2)

    # Fully auto (generation-aware batch_tile + matmul dtype).
    out_auto = jax.block_until_ready(resblock_forward(x, params))
    np.testing.assert_allclose(np.asarray(out_auto), np.asarray(ref),
                               rtol=5e-2, atol=5e-2)

    print("KERNEL_OK")
</pallas_src>

<mosaic_0001>
module attributes {stable_mosaic.version = 11 : i64} {
  func.func @resblock_kernel(%arg0: i32, %arg1: memref<32x256xf32, #tpu.memory_space<vmem>>, %arg2: memref<256x64xf32, #tpu.memory_space<vmem>>, %arg3: memref<1x64xf32, #tpu.memory_space<vmem>>, %arg4: memref<3x64x64xf32, #tpu.memory_space<vmem>>, %arg5: memref<2x32x32xf32, #tpu.memory_space<vmem>>, %arg6: memref<1x64xf32, #tpu.memory_space<vmem>>, %arg7: memref<64x128xf32, #tpu.memory_space<vmem>>, %arg8: memref<256x128xf32, #tpu.memory_space<vmem>>, %arg9: memref<1x128xf32, #tpu.memory_space<vmem>>, %arg10: memref<32x128xf32, #tpu.memory_space<vmem>>) attributes {dimension_semantics = [#tpu.dimension_semantics<parallel>], iteration_bounds = array<i64: 1>, scalar_prefetch = 0 : i64, scratch_operands = 0 : i64, tpu.core_type = #tpu.core_type<tc>, window_params = [{transform_indices = @transform_0, window_bounds = array<i64: 32, 256>}, {pipeline_mode = #tpu.pipeline_mode<synchronous>, transform_indices = @transform_1, window_bounds = array<i64: 256, 64>}, {pipeline_mode = #tpu.pipeline_mode<synchronous>, transform_indices = @transform_2, window_bounds = array<i64: 1, 64>}, {pipeline_mode = #tpu.pipeline_mode<synchronous>, transform_indices = @transform_3, window_bounds = array<i64: 3, 64, 64>}, {pipeline_mode = #tpu.pipeline_mode<synchronous>, transform_indices = @transform_4, window_bounds = array<i64: 2, 32, 32>}, {pipeline_mode = #tpu.pipeline_mode<synchronous>, transform_indices = @transform_5, window_bounds = array<i64: 1, 64>}, {pipeline_mode = #tpu.pipeline_mode<synchronous>, transform_indices = @transform_6, window_bounds = array<i64: 64, 128>}, {pipeline_mode = #tpu.pipeline_mode<synchronous>, transform_indices = @transform_7, window_bounds = array<i64: 256, 128>}, {pipeline_mode = #tpu.pipeline_mode<synchronous>, transform_indices = @transform_8, window_bounds = array<i64: 1, 128>}, {transform_indices = @transform_9, window_bounds = array<i64: 32, 128>}]} {
    %c0 = arith.constant 0 : index
    %c0_0 = arith.constant 0 : index
    %0 = vector.load %arg1[%c0, %c0_0] : memref<32x256xf32, #tpu.memory_space<vmem>>, vector<32x256xf32>
    %c0_1 = arith.constant 0 : index
    %c0_2 = arith.constant 0 : index
    %1 = vector.load %arg2[%c0_1, %c0_2] : memref<256x64xf32, #tpu.memory_space<vmem>>, vector<256x64xf32>
    %cst = arith.constant dense<0.000000e+00> : vector<32x64xf32>
    %2 = tpu.matmul %0, %1, %cst {dimension_numbers = #tpu.dot_dimension_numbers<[1], [0], [0], [1], [0, 0, 1, 1], [], []>} : vector<32x256xf32>, vector<256x64xf32>, vector<32x64xf32> -> vector<32x64xf32>
    %c0_3 = arith.constant 0 : index
    %c0_4 = arith.constant 0 : index
    %3 = vector.load %arg3[%c0_3, %c0_4] : memref<1x64xf32, #tpu.memory_space<vmem>>, vector<1x64xf32>
    %4 = vector.broadcast %3 : vector<1x64xf32> to vector<32x64xf32>
    %5 = arith.addf %2, %4 : vector<32x64xf32>
    %cst_5 = arith.constant 0.000000e+00 : f32
    %6 = vector.broadcast %cst_5 : f32 to vector<32x64xf32>
    %7 = arith.maximumf %5, %6 : vector<32x64xf32>
    %c1 = arith.constant 1 : index
    %c0_6 = arith.constant 0 : index
    %c0_7 = arith.constant 0 : index
    %8 = vector.load %arg4[%c1, %c0_6, %c0_7] : memref<3x64x64xf32, #tpu.memory_space<vmem>>, vector<1x64x64xf32>
    %9 = vector.shape_cast %8 : vector<1x64x64xf32> to vector<64x64xf32>
    %cst_8 = arith.constant dense<0.000000e+00> : vector<32x64xf32>
    %10 = tpu.matmul %7, %9, %cst_8 {dimension_numbers = #tpu.dot_dimension_numbers<[1], [0], [0], [1], [0, 0, 1, 1], [], []>} : vector<32x64xf32>, vector<64x64xf32>, vector<32x64xf32> -> vector<32x64xf32>
    %c0_9 = arith.constant 0 : index
    %c0_10 = arith.constant 0 : index
    %c0_11 = arith.constant 0 : index
    %11 = vector.load %arg5[%c0_9, %c0_10, %c0_11] : memref<2x32x32xf32, #tpu.memory_space<vmem>>, vector<1x32x32xf32>
    %12 = vector.shape_cast %11 : vector<1x32x32xf32> to vector<32x32xf32>
    %cst_12 = arith.constant dense<0.000000e+00> : vector<32x64xf32>
    %13 = tpu.matmul %12, %7, %cst_12 {dimension_numbers = #tpu.dot_dimension_numbers<[1], [0], [0], [1], [0, 0, 1, 1], [], []>} : vector<32x32xf32>, vector<32x64xf32>, vector<32x64xf32> -> vector<32x64xf32>
    %c0_13 = arith.constant 0 : index
    %c0_14 = arith.constant 0 : index
    %c0_15 = arith.constant 0 : index
    %14 = vector.load %arg4[%c0_13, %c0_14, %c0_15] : memref<3x64x64xf32, #tpu.memory_space<vmem>>, vector<1x64x64xf32>
    %15 = vector.shape_cast %14 : vector<1x64x64xf32> to vector<64x64xf32>
    %cst_16 = arith.constant dense<0.000000e+00> : vector<32x64xf32>
    %16 = tpu.matmul %13, %15, %cst_16 {dimension_numbers = #tpu.dot_dimension_numbers<[1], [0], [0], [1], [0, 0, 1, 1], [], []>} : vector<32x64xf32>, vector<64x64xf32>, vector<32x64xf32> -> vector<32x64xf32>
    %17 = arith.addf %10, %16 : vector<32x64xf32>
    %c1_17 = arith.constant 1 : index
    %c0_18 = arith.constant 0 : index
    %c0_19 = arith.constant 0 : index
    %18 = vector.load %arg5[%c1_17, %c0_18, %c0_19] : memref<2x32x32xf32, #tpu.memory_space<vmem>>, vector<1x32x32xf32>
    %19 = vector.shape_cast %18 : vector<1x32x32xf32> to vector<32x32xf32>
    %cst_20 = arith.constant dense<0.000000e+00> : vector<32x64xf32>
    %20 = tpu.matmul %19, %7, %cst_20 {dimension_numbers = #tpu.dot_dimension_numbers<[1], [0], [0], [1], [0, 0, 1, 1], [], []>} : vector<32x32xf32>, vector<32x64xf32>, vector<32x64xf32> -> vector<32x64xf32>
    %c2 = arith.constant 2 : index
    %c0_21 = arith.constant 0 : index
    %c0_22 = arith.constant 0 : index
    %21 = vector.load %arg4[%c2, %c0_21, %c0_22] : memref<3x64x64xf32, #tpu.memory_space<vmem>>, vector<1x64x64xf32>
    %22 = vector.shape_cast %21 : vector<1x64x64xf32> to vector<64x64xf32>
    %cst_23 = arith.constant dense<0.000000e+00> : vector<32x64xf32>
    %23 = tpu.matmul %20, %22, %cst_23 {dimension_numbers = #tpu.dot_dimension_numbers<[1], [0], [0], [1], [0, 0, 1, 1], [], []>} : vector<32x64xf32>, vector<64x64xf32>, vector<32x64xf32> -> vector<32x64xf32>
    %24 = arith.addf %17, %23 : vector<32x64xf32>
    %c0_24 = arith.constant 0 : index
    %c0_25 = arith.constant 0 : index
    %25 = vector.load %arg6[%c0_24, %c0_25] : memref<1x64xf32, #tpu.memory_space<vmem>>, vector<1x64xf32>
    %26 = vector.broadcast %25 : vector<1x64xf32> to vector<32x64xf32>
    %27 = arith.addf %24, %26 : vector<32x64xf32>
    %cst_26 = arith.constant 0.000000e+00 : f32
    %28 = vector.broadcast %cst_26 : f32 to vector<32x64xf32>
    %29 = arith.maximumf %27, %28 : vector<32x64xf32>
    %c0_27 = arith.constant 0 : index
    %c0_28 = arith.constant 0 : index
    %30 = vector.load %arg7[%c0_27, %c0_28] : memref<64x128xf32, #tpu.memory_space<vmem>>, vector<64x128xf32>
    %cst_29 = arith.constant dense<0.000000e+00> : vector<32x128xf32>
    %31 = tpu.matmul %29, %30, %cst_29 {dimension_numbers = #tpu.dot_dimension_numbers<[1], [0], [0], [1], [0, 0, 1, 1], [], []>} : vector<32x64xf32>, vector<64x128xf32>, vector<32x128xf32> -> vector<32x128xf32>
    %c0_30 = arith.constant 0 : index
    %c0_31 = arith.constant 0 : index
    %32 = vector.load %arg8[%c0_30, %c0_31] : memref<256x128xf32, #tpu.memory_space<vmem>>, vector<256x128xf32>
    %cst_32 = arith.constant dense<0.000000e+00> : vector<32x128xf32>
    %33 = tpu.matmul %0, %32, %cst_32 {dimension_numbers = #tpu.dot_dimension_numbers<[1], [0], [0], [1], [0, 0, 1, 1], [], []>} : vector<32x256xf32>, vector<256x128xf32>, vector<32x128xf32> -> vector<32x128xf32>
    %34 = arith.addf %31, %33 : vector<32x128xf32>
    %c0_33 = arith.constant 0 : index
    %c0_34 = arith.constant 0 : index
    %35 = vector.load %arg9[%c0_33, %c0_34] : memref<1x128xf32, #tpu.memory_space<vmem>>, vector<1x128xf32>
    %36 = vector.broadcast %35 : vector<1x128xf32> to vector<32x128xf32>
    %37 = arith.addf %34, %36 : vector<32x128xf32>
    %cst_35 = arith.constant 0.000000e+00 : f32
    %38 = vector.broadcast %cst_35 : f32 to vector<32x128xf32>
    %39 = arith.maximumf %37, %38 : vector<32x128xf32>
    %c0_36 = arith.constant 0 : index
    %c0_37 = arith.constant 0 : index
    %40 = vector.load %arg10[%c0_36, %c0_37] : memref<32x128xf32, #tpu.memory_space<vmem>>, vector<32x128xf32>
    tpu.vector_store %arg10[%c0_36, %c0_37], %39 {strides = array<i32>} : memref<32x128xf32, #tpu.memory_space<vmem>>, vector<32x128xf32>,
    return
  }
  func.func @transform_0(%arg0: i32) -> (i32, i32) {
    %c0_i32 = arith.constant 0 : i32
    %c0_i32_0 = arith.constant 0 : i32
    return %arg0, %c0_i32 : i32, i32
  }
  func.func @transform_1(%arg0: i32) -> (i32, i32) {
    %c0_i32 = arith.constant 0 : i32
    %c0_i32_0 = arith.constant 0 : i32
    %c0_i32_1 = arith.constant 0 : i32
    return %c0_i32, %c0_i32_0 : i32, i32
  }
  func.func @transform_2(%arg0: i32) -> (i32, i32) {
    %c0_i32 = arith.constant 0 : i32
    %c0_i32_0 = arith.constant 0 : i32
    %c0_i32_1 = arith.constant 0 : i32
    return %c0_i32, %c0_i32_0 : i32, i32
  }
  func.func @transform_3(%arg0: i32) -> (i32, i32, i32) {
    %c0_i32 = arith.constant 0 : i32
    %c0_i32_0 = arith.constant 0 : i32
    %c0_i32_1 = arith.constant 0 : i32
    %c0_i32_2 = arith.constant 0 : i32
    return %c0_i32, %c0_i32_0, %c0_i32_1 : i32, i32, i32
  }
  func.func @transform_4(%arg0: i32) -> (i32, i32, i32) {
    %c0_i32 = arith.constant 0 : i32
    %c0_i32_0 = arith.constant 0 : i32
    %c0_i32_1 = arith.constant 0 : i32
    %c0_i32_2 = arith.constant 0 : i32
    return %c0_i32, %c0_i32_0, %c0_i32_1 : i32, i32, i32
  }
  func.func @transform_5(%arg0: i32) -> (i32, i32) {
    %c0_i32 = arith.constant 0 : i32
    %c0_i32_0 = arith.constant 0 : i32
    %c0_i32_1 = arith.constant 0 : i32
    return %c0_i32, %c0_i32_0 : i32, i32
  }
  func.func @transform_6(%arg0: i32) -> (i32, i32) {
    %c0_i32 = arith.constant 0 : i32
    %c0_i32_0 = arith.constant 0 : i32
    %c0_i32_1 = arith.constant 0 : i32
    return %c0_i32, %c0_i32_0 : i32, i32
  }
  func.func @transform_7(%arg0: i32) -> (i32, i32) {
    %c0_i32 = arith.constant 0 : i32
    %c0_i32_0 = arith.constant 0 : i32
    %c0_i32_1 = arith.constant 0 : i32
    return %c0_i32, %c0_i32_0 : i32, i32
  }
  func.func @transform_8(%arg0: i32) -> (i32, i32) {
    %c0_i32 = arith.constant 0 : i32
    %c0_i32_0 = arith.constant 0 : i32
    %c0_i32_1 = arith.constant 0 : i32
    return %c0_i32, %c0_i32_0 : i32, i32
  }
  func.func @transform_9(%arg0: i32) -> (i32, i32) {
    %c0_i32 = arith.constant 0 : i32
    %c0_i32_0 = arith.constant 0 : i32
    return %arg0, %c0_i32 : i32, i32
  }
}

</mosaic_0001>

<llo_original>
// kernel: tpu_custom_call.1
$region0: #{tpu_custom_call.1}
  #allocation0 [shape = 'u32[]', space=smem, size = 0x4, offset = 0x4, fixed_abs, tag = 'smem constant byte address 0x4 - core index']
  #allocation1 [shape = 'u32[144,128]{1,0:T(1,128)}', space=vmem, size = 0x12000, scoped, tag = 'internal scratch']
  %s0 = inlined_call_operand.vmem [shape: f32[32,256], index: 0, kind: input, shape index: {}]
  %s1 = inlined_call_operand.vmem [shape: f32[256,64], index: 1, kind: input, shape index: {}]
  %s2 = inlined_call_operand.vmem [shape: f32[1,64], index: 2, kind: input, shape index: {}]
  %s3 = inlined_call_operand.hbm [shape: f32[3,64,64], index: 3, kind: input, shape index: {}]
  %s4 = inlined_call_operand.vmem [shape: f32[2,32,32], index: 4, kind: input, shape index: {}]
  %s5 = inlined_call_operand.vmem [shape: f32[1,64], index: 5, kind: input, shape index: {}]
  %s6 = inlined_call_operand.hbm [shape: f32[64,128], index: 6, kind: input, shape index: {}]
  %s7 = inlined_call_operand.vmem [shape: f32[256,128], index: 7, kind: input, shape index: {}]
  %s8 = inlined_call_operand.vmem [shape: f32[1,128], index: 8, kind: input, shape index: {}]
  %s9 = inlined_call_operand.hbm [shape: f32[32,128], index: 9, kind: output, shape index: {}]
  %s10 = sld [smem:[#allocation0]]
  $region54: #{tpu_custom_call.1} parent=0
    _
  %s12 = ssub.s32 1, %s10
  %s13 = scalar_select 0, %s12, %s10
  $region1: #{tpu_custom_call.1} parent=0
    #allocation2 [shape = 'u8[98304]{0}', space=vmem, size = 0x18000, scoped, tag = 'input window, operand 3, single buffered']
    #allocation3 [shape = 's32[1]{0}', space=sflag, size = 0x4, scoped, tag = 'scoped memory for tpu_custom_call.1']
    #allocation4 [shape = 's32[1]{0}', space=sflag, size = 0x4, scoped, tag = 'scoped memory for tpu_custom_call.1']
    #allocation5 [shape = 'u8[32768]{0}', space=vmem, size = 0x8000, scoped, tag = 'input window, operand 6, single buffered']
    #allocation6 [shape = 's32[1]{0}', space=sflag, size = 0x4, scoped, tag = 'scoped memory for tpu_custom_call.1']
    #allocation7 [shape = 'u8[16384]{0}', space=vmem, size = 0x4000, scoped, tag = 'output window, operand 0, single buffered']
    %14 = vsyncpa [#allocation3], 0
    %15 = vsyncpa [#allocation6], 0
    %16 = vsyncpa [#allocation4], 0
    // Predicated region
    $region2: #{tpu_custom_call.1} parent=1 // pred_check
      _
    $region3: #{tpu_custom_call.1} parent=1 // pred_check_branch
      %18 = sbr.rel (0) target = $region5
    $region4: #{tpu_custom_call.1} parent=1 // pred_region
      _
    $region5: #{tpu_custom_call.1} parent=1 // pred_fallthru
      _
    // Predicated region
    $region6: #{tpu_custom_call.1} parent=1 // pred_check
      _
    $region7: #{tpu_custom_call.1} parent=1 // pred_check_branch
      %20 = sbr.rel (0) target = $region9
    $region8: #{tpu_custom_call.1} parent=1 // pred_region
      _
    $region9: #{tpu_custom_call.1} parent=1 // pred_fallthru
      _
    // Predicated region
    $region10: #{tpu_custom_call.1} parent=1 // pred_check
      _
    $region11: #{tpu_custom_call.1} parent=1 // pred_check_branch
      %22 = sbr.rel (0) target = $region13
    $region12: #{tpu_custom_call.1} parent=1 // pred_region
      _
    $region13: #{tpu_custom_call.1} parent=1 // pred_fallthru
      _
    // Predicated region
    $region14: #{tpu_custom_call.1} parent=1 // pred_check
      _
    $region15: #{tpu_custom_call.1} parent=1 // pred_check_branch
      %24 = sbr.rel (0) target = $region17
    $region16: #{tpu_custom_call.1} parent=1 // pred_region
      %s26 = ssub.s32 3072, 3072
      %27 = vsyncadd [#allocation3], %s26
      %s28 = sshll.u32 [#allocation2], 4
      %s29 = int_to_ptr.vmem [resolvable:$true] %s28
      %34 = dma.hbm_to_vmem [thread:$0]  %s3, 3072, %s29, [#allocation3], 128, 128, 8
    $region17: #{tpu_custom_call.1} parent=1 // pred_fallthru
      _
    // Predicated region
    $region18: #{tpu_custom_call.1} parent=1 // pred_check
      _
    $region19: #{tpu_custom_call.1} parent=1 // pred_check_branch
      %36 = sbr.rel (0) target = $region21
    $region20: #{tpu_custom_call.1} parent=1 // pred_region
      _
    $region21: #{tpu_custom_call.1} parent=1 // pred_fallthru
      _
    // Predicated region
    $region22: #{tpu_custom_call.1} parent=1 // pred_check
      _
    $region23: #{tpu_custom_call.1} parent=1 // pred_check_branch
      %38 = sbr.rel (0) target = $region25
    $region24: #{tpu_custom_call.1} parent=1 // pred_region
      _
    $region25: #{tpu_custom_call.1} parent=1 // pred_fallthru
      _
    // Predicated region
    $region26: #{tpu_custom_call.1} parent=1 // pred_check
      _
    $region27: #{tpu_custom_call.1} parent=1 // pred_check_branch
      %40 = sbr.rel (0) target = $region29
    $region28: #{tpu_custom_call.1} parent=1 // pred_region
      %s42 = ssub.s32 1024, 1024
      %43 = vsyncadd [#allocation6], %s42
      %s44 = sshll.u32 [#allocation5], 4
      %s45 = int_to_ptr.vmem [resolvable:$true] %s44
      %50 = dma.hbm_to_vmem [thread:$0]  %s6, 1024, %s45, [#allocation6], 128, 128, 8
    $region29: #{tpu_custom_call.1} parent=1 // pred_fallthru
      _
    // Predicated region
    $region30: #{tpu_custom_call.1} parent=1 // pred_check
      _
    $region31: #{tpu_custom_call.1} parent=1 // pred_check_branch
      %52 = sbr.rel (0) target = $region33
    $region32: #{tpu_custom_call.1} parent=1 // pred_region
      _
    $region33: #{tpu_custom_call.1} parent=1 // pred_fallthru
      _
    // Predicated region
    $region34: #{tpu_custom_call.1} parent=1 // pred_check
      _
    $region35: #{tpu_custom_call.1} parent=1 // pred_check_branch
      %54 = sbr.rel (0) target = $region37
    $region36: #{tpu_custom_call.1} parent=1 // pred_region
      _
    $region37: #{tpu_custom_call.1} parent=1 // pred_fallthru
      _
    // Predicated region
    $region38: #{tpu_custom_call.1} parent=1 // pred_check
      _
    $region39: #{tpu_custom_call.1} parent=1 // pred_check_branch
      %56 = sbr.rel (0) target = $region41
    $region40: #{tpu_custom_call.1} parent=1 // pred_region
      %57 = dma.done [#allocation3], 3072
    $region41: #{tpu_custom_call.1} parent=1 // pred_fallthru
      _
    // Predicated region
    $region42: #{tpu_custom_call.1} parent=1 // pred_check
      _
    $region43: #{tpu_custom_call.1} parent=1 // pred_check_branch
      %59 = sbr.rel (0) target = $region45
    $region44: #{tpu_custom_call.1} parent=1 // pred_region
      %60 = dma.done [#allocation6], 1024
    $region45: #{tpu_custom_call.1} parent=1 // pred_fallthru
      _
    %v61 = vld [vmem:[%s0] sm:$0xff]
    %v62 = vld [vmem:[%s0 + $0x8] sm:$0xff]
    %v63 = vld [vmem:[%s0 + $0x10] sm:$0xff]
    %v64 = vld [vmem:[%s0 + $0x18] sm:$0xff]
    %v65 = vld [vmem:[%s0 + $0x20] sm:$0xff]
    %v66 = vld [vmem:[%s0 + $0x28] sm:$0xff]
    %v67 = vld [vmem:[%s0 + $0x30] sm:$0xff]
    %v68 = vld [vmem:[%s0 + $0x38] sm:$0xff]
    %v69 = vld [vmem:[%s1] sm:$0xff]
    %v70 = vld [vmem:[%s1 + $0x8] sm:$0xff]
    %v71 = vld [vmem:[%s1 + $0x10] sm:$0xff]
    %v72 = vld [vmem:[%s1 + $0x18] sm:$0xff]
    %v73 = vld [vmem:[%s1 + $0x20] sm:$0xff]
    %v74 = vld [vmem:[%s1 + $0x28] sm:$0xff]
    %v75 = vld [vmem:[%s1 + $0x30] sm:$0xff]
    %v76 = vld [vmem:[%s1 + $0x38] sm:$0xff]
    %v77 = vld [vmem:[%s1 + $0x40] sm:$0xff]
    %v78 = vld [vmem:[%s1 + $0x48] sm:$0xff]
    %v79 = vld [vmem:[%s1 + $0x50] sm:$0xff]
    %v80 = vld [vmem:[%s1 + $0x58] sm:$0xff]
    %v81 = vld [vmem:[%s1 + $0x60] sm:$0xff]
    %v82 = vld [vmem:[%s1 + $0x68] sm:$0xff]
    %v83 = vld [vmem:[%s1 + $0x70] sm:$0xff]
    %v84 = vld [vmem:[%s1 + $0x78] sm:$0xff]
    %v85 = vld [vmem:[%s1 + $0x80] sm:$0xff]
    %v86 = vld [vmem:[%s1 + $0x88] sm:$0xff]
    %v87 = vld [vmem:[%s1 + $0x90] sm:$0xff]
    %v88 = vld [vmem:[%s1 + $0x98] sm:$0xff]
    %v89 = vld [vmem:[%s1 + $0xa0] sm:$0xff]
    %v90 = vld [vmem:[%s1 + $0xa8] sm:$0xff]
    %v91 = vld [vmem:[%s1 + $0xb0] sm:$0xff]
    %v92 = vld [vmem:[%s1 + $0xb8] sm:$0xff]
    %v93 = vld [vmem:[%s1 + $0xc0] sm:$0xff]
    %v94 = vld [vmem:[%s1 + $0xc8] sm:$0xff]
    %v95 = vld [vmem:[%s1 + $0xd0] sm:$0xff]
    %v96 = vld [vmem:[%s1 + $0xd8] sm:$0xff]
    %v97 = vld [vmem:[%s1 + $0xe0] sm:$0xff]
    %v98 = vld [vmem:[%s1 + $0xe8] sm:$0xff]
    %v99 = vld [vmem:[%s1 + $0xf0] sm:$0xff]
    %v100 = vld [vmem:[%s1 + $0xf8] sm:$0xff]
    %v101 = vld [vmem:[%s2] sm:$0x1]
    %v103 = vlaneseq
    %v104 = vshrl.u32 %v103, 7
    %v105 = vsub.s32 0, %v104
    %v106 = vrot.slane %v101, %v105
    %108 = vmatprep.subr.mxu0 0.0
    %109 = vmatpush1.msra.mxu0 %v84
    %110 = vmatprep.subr.mxu0 0.0
    %111 = vmatpush1.msra.mxu0 %v83
    %112 = vmatprep.subr.mxu0 0.0
    %113 = vmatpush1.msra.mxu0 %v82
    %114 = vmatprep.subr.mxu0 0.0
    %115 = vmatpush1.msra.mxu0 %v81
    %116 = vmatprep.subr.mxu0 0.0
    %117 = vmatpush1.msra.mxu0 %v80
    %118 = vmatprep.subr.mxu0 0.0
    %119 = vmatpush1.msra.mxu0 %v79
    %120 = vmatprep.subr.mxu0 0.0
    %121 = vmatpush1.msra.mxu0 %v78
    %122 = vmatprep.subr.mxu0 0.0
    %123 = vmatpush1.msra.mxu0 %v77
    %124 = vmatprep.subr.mxu0 0.0
    %125 = vmatpush1.msra.mxu0 %v76
    %126 = vmatprep.subr.mxu0 0.0
    %127 = vmatpush1.msra.mxu0 %v75
    %128 = vmatprep.subr.mxu0 0.0
    %129 = vmatpush1.msra.mxu0 %v74
    %130 = vmatprep.subr.mxu0 0.0
    %131 = vmatpush1.msra.mxu0 %v73
    %132 = vmatprep.subr.mxu0 0.0
    %133 = vmatpush1.msra.mxu0 %v72
    %134 = vmatprep.subr.mxu0 0.0
    %135 = vmatpush1.msra.mxu0 %v71
    %136 = vmatprep.subr.mxu0 0.0
    %137 = vmatpush1.msra.mxu0 %v70
    %138 = vmatprep.subr.mxu0 0.0
    %139 = vmatpush1.msra.mxu0 %v69
    %140 = vmatprep.subr.mxu0 0.0
    %141 = vmatpush2.msra.mxu0 %v100
    %142 = vmatprep.subr.mxu0 0.0
    %143 = vmatpush2.msra.mxu0 %v99
    %144 = vmatprep.subr.mxu0 0.0
    %145 = vmatpush2.msra.mxu0 %v98
    %146 = vmatprep.subr.mxu0 0.0
    %147 = vmatpush2.msra.mxu0 %v97
    %148 = vmatprep.subr.mxu0 0.0
    %149 = vmatpush2.msra.mxu0 %v96
    %150 = vmatprep.subr.mxu0 0.0
    %151 = vmatpush2.msra.mxu0 %v95
    %152 = vmatprep.subr.mxu0 0.0
    %153 = vmatpush2.msra.mxu0 %v94
    %154 = vmatprep.subr.mxu0 0.0
    %155 = vmatpush2.msra.mxu0 %v93
    %156 = vmatprep.subr.mxu0 0.0
    %157 = vmatpush2.msra.mxu0 %v92
    %158 = vmatprep.subr.mxu0 0.0
    %159 = vmatpush2.msra.mxu0 %v91
    %160 = vmatprep.subr.mxu0 0.0
    %161 = vmatpush2.msra.mxu0 %v90
    %162 = vmatprep.subr.mxu0 0.0
    %163 = vmatpush2.msra.mxu0 %v89
    %164 = vmatprep.subr.mxu0 0.0
    %165 = vmatpush2.msra.mxu0 %v88
    %166 = vmatprep.subr.mxu0 0.0
    %167 = vmatpush2.msra.mxu0 %v87
    %168 = vmatprep.subr.mxu0 0.0
    %169 = vmatpush2.msra.mxu0 %v86
    %170 = vmatprep.subr.mxu0 0.0
    %171 = vmatpush2.msra.mxu0 %v85
    %172 = vmatprep.mubr.f32.mxu0 %v62
    %173 = vmatmul.mubr.f32.gmra.mxu0 %v61
    %v174 = vpop.f32.mrf.mxu0
    %v175 = vadd.f32 %v106, %v174
    %v176 = vpop.f32.mrf.mxu0
    %177 = vmatprep.mubr.f32.mxu0 %v64
    %178 = vmatmul.mubr.f32.gmra.mxu0 %v63
    %v179 = vpop.f32.mrf.mxu0
    %v180 = vadd.f32 %v106, %v179
    %v181 = vpop.f32.mrf.mxu0
    %182 = vmatprep.mubr.f32.mxu0 %v66
    %183 = vmatmul.mubr.f32.gmra.mxu0 %v65
    %v184 = vpop.f32.mrf.mxu0
    %v185 = vadd.f32 %v106, %v184
    %v186 = vpop.f32.mrf.mxu0
    %187 = vmatprep.mubr.f32.mxu0 %v68
    %188 = vmatmul.mubr.f32.gmra.mxu0 %v67
    %v189 = vpop.f32.mrf.mxu0
    %v190 = vadd.f32 %v106, %v189
    %v191 = vpop.f32.mrf.mxu0
    %192 = vdwg.mxu0
    %v193 = vmax.f32 %v175, 0.0
    %v194 = vmax.f32 %v180, 0.0
    %v195 = vmax.f32 %v185, 0.0
    %v196 = vmax.f32 %v190, 0.0
    %s197 = scalar_lea.vmem [#allocation2], 64
    %v198 = vld [vmem:[%s197] sm:$0xff]
    %v199 = vld [vmem:[%s197 + $0x8] sm:$0xff]
    %v200 = vld [vmem:[%s197 + $0x10] sm:$0xff]
    %v201 = vld [vmem:[%s197 + $0x18] sm:$0xff]
    %v202 = vld [vmem:[%s197 + $0x20] sm:$0xff]
    %v203 = vld [vmem:[%s197 + $0x28] sm:$0xff]
    %v204 = vld [vmem:[%s197 + $0x30] sm:$0xff]
    %v205 = vld [vmem:[%s197 + $0x38] sm:$0xff]
    %v206 = vld [vmem:[%s4] sm:$0xff]
    %v207 = vld [vmem:[%s4 + $0x8] sm:$0xff]
    %v208 = vld [vmem:[%s4 + $0x10] sm:$0xff]
    %v209 = vld [vmem:[%s4 + $0x18] sm:$0xff]
    %vm210 = vcmask 261120
    %v212 = vsel %vm210, %v206, 0
    %v215 = vsel %vm210, %v207, 0
    %v218 = vsel %vm210, %v208, 0
    %v221 = vsel %vm210, %v209, 0
    %223 = vmatprep.subr.mxu0 0.0
    %224 = vmatpush1.msra.mxu0 0.0
    %225 = vmatprep.subr.mxu0 0.0
    %226 = vmatpush1.msra.mxu0 0.0
    %227 = vmatprep.subr.mxu0 0.0
    %228 = vmatpush1.msra.mxu0 0.0
    %229 = vmatprep.subr.mxu0 0.0
    %230 = vmatpush1.msra.mxu0 0.0
    %231 = vmatprep.subr.mxu0 0.0
    %232 = vmatpush1.msra.mxu0 0.0
    %233 = vmatprep.subr.mxu0 0.0
    %234 = vmatpush1.msra.mxu0 0.0
    %235 = vmatprep.subr.mxu0 0.0
    %236 = vmatpush1.msra.mxu0 0.0
    %237 = vmatprep.subr.mxu0 0.0
    %238 = vmatpush1.msra.mxu0 0.0
    %239 = vmatprep.subr.mxu0 0.0
    %240 = vmatpush1.msra.mxu0 0.0
    %241 = vmatprep.subr.mxu0 0.0
    %242 = vmatpush1.msra.mxu0 0.0
    %243 = vmatprep.subr.mxu0 0.0
    %244 = vmatpush1.msra.mxu0 0.0
    %245 = vmatprep.subr.mxu0 0.0
    %246 = vmatpush1.msra.mxu0 0.0
    %247 = vmatprep.subr.mxu0 0.0
    %248 = vmatpush1.msra.mxu0 %v196
    %249 = vmatprep.subr.mxu0 0.0
    %250 = vmatpush1.msra.mxu0 %v195
    %251 = vmatprep.subr.mxu0 0.0
    %252 = vmatpush1.msra.mxu0 %v194
    %253 = vmatprep.subr.mxu0 0.0
    %254 = vmatpush1.msra.mxu0 %v193
    %255 = vmatprep.subr.mxu0 0.0
    %256 = vmatpush2.msra.mxu0 0.0
    %257 = vmatprep.subr.mxu0 0.0
    %258 = vmatpush2.msra.mxu0 0.0
    %259 = vmatprep.subr.mxu0 0.0
    %260 = vmatpush2.msra.mxu0 0.0
    %261 = vmatprep.subr.mxu0 0.0
    %262 = vmatpush2.msra.mxu0 0.0
    %263 = vmatprep.subr.mxu0 0.0
    %264 = vmatpush2.msra.mxu0 0.0
    %265 = vmatprep.subr.mxu0 0.0
    %266 = vmatpush2.msra.mxu0 0.0
    %267 = vmatprep.subr.mxu0 0.0
    %268 = vmatpush2.msra.mxu0 0.0
    %269 = vmatprep.subr.mxu0 0.0
    %270 = vmatpush2.msra.mxu0 0.0
    %271 = vmatprep.subr.mxu0 0.0
    %272 = vmatpush2.msra.mxu0 0.0
    %273 = vmatprep.subr.mxu0 0.0
    %274 = vmatpush2.msra.mxu0 0.0
    %275 = vmatprep.subr.mxu0 0.0
    %276 = vmatpush2.msra.mxu0 0.0
    %277 = vmatprep.subr.mxu0 0.0
    %278 = vmatpush2.msra.mxu0 0.0
    %279 = vmatprep.subr.mxu0 0.0
    %280 = vmatpush2.msra.mxu0 0.0
    %281 = vmatprep.subr.mxu0 0.0
    %282 = vmatpush2.msra.mxu0 0.0
    %283 = vmatprep.subr.mxu0 0.0
    %284 = vmatpush2.msra.mxu0 0.0
    %285 = vmatprep.subr.mxu0 0.0
    %286 = vmatpush2.msra.mxu0 0.0
    %287 = vmatprep.mubr.f32.mxu0 0.0
    %288 = vmatmul.mubr.f32.gmra.mxu0 %v212
    %v289 = vpop.f32.mrf.mxu0
    %v290 = vadd.f32 0.0, %v289
    %v291 = vpop.f32.mrf.mxu0
    %292 = vmatprep.mubr.f32.mxu0 0.0
    %293 = vmatmul.mubr.f32.gmra.mxu0 %v215
    %v294 = vpop.f32.mrf.mxu0
    %v295 = vadd.f32 0.0, %v294
    %v296 = vpop.f32.mrf.mxu0
    %297 = vmatprep.mubr.f32.mxu0 0.0
    %298 = vmatmul.mubr.f32.gmra.mxu0 %v218
    %v299 = vpop.f32.mrf.mxu0
    %v300 = vadd.f32 0.0, %v299
    %v301 = vpop.f32.mrf.mxu0
    %302 = vmatprep.mubr.f32.mxu0 0.0
    %303 = vmatmul.mubr.f32.gmra.mxu0 %v221
    %v304 = vpop.f32.mrf.mxu0
    %v305 = vadd.f32 0.0, %v304
    %v306 = vpop.f32.mrf.mxu0
    %307 = vdwg.mxu0
    %v308 = vld [vmem:[#allocation2] sm:$0xff]
    %v309 = vld [vmem:[#allocation2 + $0x8] sm:$0xff]
    %v310 = vld [vmem:[#allocation2 + $0x10] sm:$0xff]
    %v311 = vld [vmem:[#allocation2 + $0x18] sm:$0xff]
    %v312 = vld [vmem:[#allocation2 + $0x20] sm:$0xff]
    %v313 = vld [vmem:[#allocation2 + $0x28] sm:$0xff]
    %v314 = vld [vmem:[#allocation2 + $0x30] sm:$0xff]
    %v315 = vld [vmem:[#allocation2 + $0x38] sm:$0xff]
    %vm316 = vcmask 523264
    %v318 = vsel %vm316, %v290, 0
    %v321 = vsel %vm316, %v295, 0
    %v324 = vsel %vm316, %v300, 0
    %v327 = vsel %vm316, %v305, 0
    %329 = vmatprep.subr.mxu0 0.0
    %330 = vmatpush1.msra.mxu0 0.0
    %331 = vmatprep.subr.mxu0 0.0
    %332 = vmatpush1.msra.mxu0 0.0
    %333 = vmatprep.subr.mxu0 0.0
    %334 = vmatpush1.msra.mxu0 0.0
    %335 = vmatprep.subr.mxu0 0.0
    %336 = vmatpush1.msra.mxu0 0.0
    %337 = vmatprep.subr.mxu0 0.0
    %338 = vmatpush1.msra.mxu0 0.0
    %339 = vmatprep.subr.mxu0 0.0
    %340 = vmatpush1.msra.mxu0 0.0
    %341 = vmatprep.subr.mxu0 0.0
    %342 = vmatpush1.msra.mxu0 0.0
    %343 = vmatprep.subr.mxu0 0.0
    %344 = vmatpush1.msra.mxu0 0.0
    %345 = vmatprep.subr.mxu0 0.0
    %346 = vmatpush1.msra.mxu0 %v315
    %347 = vmatprep.subr.mxu0 0.0
    %348 = vmatpush1.msra.mxu0 %v314
    %349 = vmatprep.subr.mxu0 0.0
    %350 = vmatpush1.msra.mxu0 %v313
    %351 = vmatprep.subr.mxu0 0.0
    %352 = vmatpush1.msra.mxu0 %v312
    %353 = vmatprep.subr.mxu0 0.0
    %354 = vmatpush1.msra.mxu0 %v311
    %355 = vmatprep.subr.mxu0 0.0
    %356 = vmatpush1.msra.mxu0 %v310
    %357 = vmatprep.subr.mxu0 0.0
    %358 = vmatpush1.msra.mxu0 %v309
    %359 = vmatprep.subr.mxu0 0.0
    %360 = vmatpush1.msra.mxu0 %v308
    %361 = vmatprep.subr.mxu0 0.0
    %362 = vmatpush2.msra.mxu0 0.0
    %363 = vmatprep.subr.mxu0 0.0
    %364 = vmatpush2.msra.mxu0 0.0
    %365 = vmatprep.subr.mxu0 0.0
    %366 = vmatpush2.msra.mxu0 0.0
    %367 = vmatprep.subr.mxu0 0.0
    %368 = vmatpush2.msra.mxu0 0.0
    %369 = vmatprep.subr.mxu0 0.0
    %370 = vmatpush2.msra.mxu0 0.0
    %371 = vmatprep.subr.mxu0 0.0
    %372 = vmatpush2.msra.mxu0 0.0
    %373 = vmatprep.subr.mxu0 0.0
    %374 = vmatpush2.msra.mxu0 0.0
    %375 = vmatprep.subr.mxu0 0.0
    %376 = vmatpush2.msra.mxu0 0.0
    %377 = vmatprep.subr.mxu0 0.0
    %378 = vmatpush2.msra.mxu0 0.0
    %379 = vmatprep.subr.mxu0 0.0
    %380 = vmatpush2.msra.mxu0 0.0
    %381 = vmatprep.subr.mxu0 0.0
    %382 = vmatpush2.msra.mxu0 0.0
    %383 = vmatprep.subr.mxu0 0.0
    %384 = vmatpush2.msra.mxu0 0.0
    %385 = vmatprep.subr.mxu0 0.0
    %386 = vmatpush2.msra.mxu0 0.0
    %387 = vmatprep.subr.mxu0 0.0
    %388 = vmatpush2.msra.mxu0 0.0
    %389 = vmatprep.subr.mxu0 0.0
    %390 = vmatpush2.msra.mxu0 0.0
    %391 = vmatprep.subr.mxu0 0.0
    %392 = vmatpush2.msra.mxu0 0.0
    %393 = vmatprep.mubr.f32.mxu0 0.0
    %394 = vmatmul.mubr.f32.gmra.mxu0 %v318
    %v395 = vpop.f32.mrf.mxu0
    %v396 = vadd.f32 0.0, %v395
    %v397 = vpop.f32.mrf.mxu0
    %398 = vmatprep.mubr.f32.mxu0 0.0
    %399 = vmatmul.mubr.f32.gmra.mxu0 %v321
    %v400 = vpop.f32.mrf.mxu0
    %v401 = vadd.f32 0.0, %v400
    %v402 = vpop.f32.mrf.mxu0
    %403 = vmatprep.mubr.f32.mxu0 0.0
    %404 = vmatmul.mubr.f32.gmra.mxu0 %v324
    %v405 = vpop.f32.mrf.mxu0
    %v406 = vadd.f32 0.0, %v405
    %v407 = vpop.f32.mrf.mxu0
    %408 = vmatprep.mubr.f32.mxu0 0.0
    %409 = vmatmul.mubr.f32.gmra.mxu0 %v327
    %v410 = vpop.f32.mrf.mxu0
    %v411 = vadd.f32 0.0, %v410
    %v412 = vpop.f32.mrf.mxu0
    %413 = vdwg.mxu0
    %v415 = vsel %vm316, %v193, 0
    %v418 = vsel %vm316, %v194, 0
    %v421 = vsel %vm316, %v195, 0
    %v424 = vsel %vm316, %v196, 0
    %426 = vmatprep.subr.mxu0 0.0
    %427 = vmatpush1.msra.mxu0 0.0
    %428 = vmatprep.subr.mxu0 0.0
    %429 = vmatpush1.msra.mxu0 0.0
    %430 = vmatprep.subr.mxu0 0.0
    %431 = vmatpush1.msra.mxu0 0.0
    %432 = vmatprep.subr.mxu0 0.0
    %433 = vmatpush1.msra.mxu0 0.0
    %434 = vmatprep.subr.mxu0 0.0
    %435 = vmatpush1.msra.mxu0 0.0
    %436 = vmatprep.subr.mxu0 0.0
    %437 = vmatpush1.msra.mxu0 0.0
    %438 = vmatprep.subr.mxu0 0.0
    %439 = vmatpush1.msra.mxu0 0.0
    %440 = vmatprep.subr.mxu0 0.0
    %441 = vmatpush1.msra.mxu0 0.0
    %442 = vmatprep.subr.mxu0 0.0
    %443 = vmatpush1.msra.mxu0 %v205
    %444 = vmatprep.subr.mxu0 0.0
    %445 = vmatpush1.msra.mxu0 %v204
    %446 = vmatprep.subr.mxu0 0.0
    %447 = vmatpush1.msra.mxu0 %v203
    %448 = vmatprep.subr.mxu0 0.0
    %449 = vmatpush1.msra.mxu0 %v202
    %450 = vmatprep.subr.mxu0 0.0
    %451 = vmatpush1.msra.mxu0 %v201
    %452 = vmatprep.subr.mxu0 0.0
    %453 = vmatpush1.msra.mxu0 %v200
    %454 = vmatprep.subr.mxu0 0.0
    %455 = vmatpush1.msra.mxu0 %v199
    %456 = vmatprep.subr.mxu0 0.0
    %457 = vmatpush1.msra.mxu0 %v198
    %458 = vmatprep.subr.mxu0 0.0
    %459 = vmatpush2.msra.mxu0 0.0
    %460 = vmatprep.subr.mxu0 0.0
    %461 = vmatpush2.msra.mxu0 0.0
    %462 = vmatprep.subr.mxu0 0.0
    %463 = vmatpush2.msra.mxu0 0.0
    %464 = vmatprep.subr.mxu0 0.0
    %465 = vmatpush2.msra.mxu0 0.0
    %466 = vmatprep.subr.mxu0 0.0
    %467 = vmatpush2.msra.mxu0 0.0
    %468 = vmatprep.subr.mxu0 0.0
    %469 = vmatpush2.msra.mxu0 0.0
    %470 = vmatprep.subr.mxu0 0.0
    %471 = vmatpush2.msra.mxu0 0.0
    %472 = vmatprep.subr.mxu0 0.0
    %473 = vmatpush2.msra.mxu0 0.0
    %474 = vmatprep.subr.mxu0 0.0
    %475 = vmatpush2.msra.mxu0 0.0
    %476 = vmatprep.subr.mxu0 0.0
    %477 = vmatpush2.msra.mxu0 0.0
    %478 = vmatprep.subr.mxu0 0.0
    %479 = vmatpush2.msra.mxu0 0.0
    %480 = vmatprep.subr.mxu0 0.0
    %481 = vmatpush2.msra.mxu0 0.0
    %482 = vmatprep.subr.mxu0 0.0
    %483 = vmatpush2.msra.mxu0 0.0
    %484 = vmatprep.subr.mxu0 0.0
    %485 = vmatpush2.msra.mxu0 0.0
    %486 = vmatprep.subr.mxu0 0.0
    %487 = vmatpush2.msra.mxu0 0.0
    %488 = vmatprep.subr.mxu0 0.0
    %489 = vmatpush2.msra.mxu0 0.0
    %490 = vmatprep.mubr.f32.mxu0 0.0
    %491 = vmatmul.mubr.f32.gmra.mxu0 %v415
    %v492 = vpop.f32.mrf.mxu0
    %v493 = vadd.f32 %v396, %v492
    %v494 = vpop.f32.mrf.mxu0
    %495 = vmatprep.mubr.f32.mxu0 0.0
    %496 = vmatmul.mubr.f32.gmra.mxu0 %v418
    %v497 = vpop.f32.mrf.mxu0
    %v498 = vadd.f32 %v401, %v497
    %v499 = vpop.f32.mrf.mxu0
    %500 = vmatprep.mubr.f32.mxu0 0.0
    %501 = vmatmul.mubr.f32.gmra.mxu0 %v421
    %v502 = vpop.f32.mrf.mxu0
    %v503 = vadd.f32 %v406, %v502
    %v504 = vpop.f32.mrf.mxu0
    %505 = vmatprep.mubr.f32.mxu0 0.0
    %506 = vmatmul.mubr.f32.gmra.mxu0 %v424
    %v507 = vpop.f32.mrf.mxu0
    %v508 = vadd.f32 %v411, %v507
    %v509 = vpop.f32.mrf.mxu0
    %510 = vdwg.mxu0
    %s511 = scalar_lea.vmem %s4, 32
    %v512 = vld [vmem:[%s511] sm:$0xff]
    %v513 = vld [vmem:[%s511 + $0x8] sm:$0xff]
    %v514 = vld [vmem:[%s511 + $0x10] sm:$0xff]
    %v515 = vld [vmem:[%s511 + $0x18] sm:$0xff]
    %v517 = vsel %vm210, %v512, 0
    %v520 = vsel %vm210, %v513, 0
    %v523 = vsel %vm210, %v514, 0
    %v526 = vsel %vm210, %v515, 0
    %528 = vmatprep.subr.mxu0 0.0
    %529 = vmatpush1.msra.mxu0 0.0
    %530 = vmatprep.subr.mxu0 0.0
    %531 = vmatpush1.msra.mxu0 0.0
    %532 = vmatprep.subr.mxu0 0.0
    %533 = vmatpush1.msra.mxu0 0.0
    %534 = vmatprep.subr.mxu0 0.0
    %535 = vmatpush1.msra.mxu0 0.0
    %536 = vmatprep.subr.mxu0 0.0
    %537 = vmatpush1.msra.mxu0 0.0
    %538 = vmatprep.subr.mxu0 0.0
    %539 = vmatpush1.msra.mxu0 0.0
    %540 = vmatprep.subr.mxu0 0.0
    %541 = vmatpush1.msra.mxu0 0.0
    %542 = vmatprep.subr.mxu0 0.0
    %543 = vmatpush1.msra.mxu0 0.0
    %544 = vmatprep.subr.mxu0 0.0
    %545 = vmatpush1.msra.mxu0 0.0
    %546 = vmatprep.subr.mxu0 0.0
    %547 = vmatpush1.msra.mxu0 0.0
    %548 = vmatprep.subr.mxu0 0.0
    %549 = vmatpush1.msra.mxu0 0.0
    %550 = vmatprep.subr.mxu0 0.0
    %551 = vmatpush1.msra.mxu0 0.0
    %552 = vmatprep.subr.mxu0 0.0
    %553 = vmatpush1.msra.mxu0 %v196
    %554 = vmatprep.subr.mxu0 0.0
    %555 = vmatpush1.msra.mxu0 %v195
    %556 = vmatprep.subr.mxu0 0.0
    %557 = vmatpush1.msra.mxu0 %v194
    %558 = vmatprep.subr.mxu0 0.0
    %559 = vmatpush1.msra.mxu0 %v193
    %560 = vmatprep.subr.mxu0 0.0
    %561 = vmatpush2.msra.mxu0 0.0
    %562 = vmatprep.subr.mxu0 0.0
    %563 = vmatpush2.msra.mxu0 0.0
    %564 = vmatprep.subr.mxu0 0.0
    %565 = vmatpush2.msra.mxu0 0.0
    %566 = vmatprep.subr.mxu0 0.0
    %567 = vmatpush2.msra.mxu0 0.0
    %568 = vmatprep.subr.mxu0 0.0
    %569 = vmatpush2.msra.mxu0 0.0
    %570 = vmatprep.subr.mxu0 0.0
    %571 = vmatpush2.msra.mxu0 0.0
    %572 = vmatprep.subr.mxu0 0.0
    %573 = vmatpush2.msra.mxu0 0.0
    %574 = vmatprep.subr.mxu0 0.0
    %575 = vmatpush2.msra.mxu0 0.0
    %576 = vmatprep.subr.mxu0 0.0
    %577 = vmatpush2.msra.mxu0 0.0
    %578 = vmatprep.subr.mxu0 0.0
    %579 = vmatpush2.msra.mxu0 0.0
    %580 = vmatprep.subr.mxu0 0.0
    %581 = vmatpush2.msra.mxu0 0.0
    %582 = vmatprep.subr.mxu0 0.0
    %583 = vmatpush2.msra.mxu0 0.0
    %584 = vmatprep.subr.mxu0 0.0
    %585 = vmatpush2.msra.mxu0 0.0
    %586 = vmatprep.subr.mxu0 0.0
    %587 = vmatpush2.msra.mxu0 0.0
    %588 = vmatprep.subr.mxu0 0.0
    %589 = vmatpush2.msra.mxu0 0.0
    %590 = vmatprep.subr.mxu0 0.0
    %591 = vmatpush2.msra.mxu0 0.0
    %592 = vmatprep.mubr.f32.mxu0 0.0
    %593 = vmatmul.mubr.f32.gmra.mxu0 %v517
    %v594 = vpop.f32.mrf.mxu0
    %v595 = vadd.f32 0.0, %v594
    %v596 = vpop.f32.mrf.mxu0
    %597 = vmatprep.mubr.f32.mxu0 0.0
    %598 = vmatmul.mubr.f32.gmra.mxu0 %v520
    %v599 = vpop.f32.mrf.mxu0
    %v600 = vadd.f32 0.0, %v599
    %v601 = vpop.f32.mrf.mxu0
    %602 = vmatprep.mubr.f32.mxu0 0.0
    %603 = vmatmul.mubr.f32.gmra.mxu0 %v523
    %v604 = vpop.f32.mrf.mxu0
    %v605 = vadd.f32 0.0, %v604
    %v606 = vpop.f32.mrf.mxu0
    %607 = vmatprep.mubr.f32.mxu0 0.0
    %608 = vmatmul.mubr.f32.gmra.mxu0 %v526
    %v609 = vpop.f32.mrf.mxu0
    %v610 = vadd.f32 0.0, %v609
    %v611 = vpop.f32.mrf.mxu0
    %612 = vdwg.mxu0
    %s613 = scalar_lea.vmem [#allocation2], 128
    %v614 = vld [vmem:[%s613] sm:$0xff]
    %v615 = vld [vmem:[%s613 + $0x8] sm:$0xff]
    %v616 = vld [vmem:[%s613 + $0x10] sm:$0xff]
    %v617 = vld [vmem:[%s613 + $0x18] sm:$0xff]
    %v618 = vld [vmem:[%s613 + $0x20] sm:$0xff]
    %v619 = vld [vmem:[%s613 + $0x28] sm:$0xff]
    %v620 = vld [vmem:[%s613 + $0x30] sm:$0xff]
    %v621 = vld [vmem:[%s613 + $0x38] sm:$0xff]
    %v623 = vsel %vm316, %v595, 0
    %v626 = vsel %vm316, %v600, 0
    %v629 = vsel %vm316, %v605, 0
    %v632 = vsel %vm316, %v610, 0
    %634 = vmatprep.subr.mxu0 0.0
    %635 = vmatpush1.msra.mxu0 0.0
    %636 = vmatprep.subr.mxu0 0.0
    %637 = vmatpush1.msra.mxu0 0.0
    %638 = vmatprep.subr.mxu0 0.0
    %639 = vmatpush1.msra.mxu0 0.0
    %640 = vmatprep.subr.mxu0 0.0
    %641 = vmatpush1.msra.mxu0 0.0
    %642 = vmatprep.subr.mxu0 0.0
    %643 = vmatpush1.msra.mxu0 0.0
    %644 = vmatprep.subr.mxu0 0.0
    %645 = vmatpush1.msra.mxu0 0.0
    %646 = vmatprep.subr.mxu0 0.0
    %647 = vmatpush1.msra.mxu0 0.0
    %648 = vmatprep.subr.mxu0 0.0
    %649 = vmatpush1.msra.mxu0 0.0
    %650 = vmatprep.subr.mxu0 0.0
    %651 = vmatpush1.msra.mxu0 %v621
    %652 = vmatprep.subr.mxu0 0.0
    %653 = vmatpush1.msra.mxu0 %v620
    %654 = vmatprep.subr.mxu0 0.0
    %655 = vmatpush1.msra.mxu0 %v619
    %656 = vmatprep.subr.mxu0 0.0
    %657 = vmatpush1.msra.mxu0 %v618
    %658 = vmatprep.subr.mxu0 0.0
    %659 = vmatpush1.msra.mxu0 %v617
    %660 = vmatprep.subr.mxu0 0.0
    %661 = vmatpush1.msra.mxu0 %v616
    %662 = vmatprep.subr.mxu0 0.0
    %663 = vmatpush1.msra.mxu0 %v615
    %664 = vmatprep.subr.mxu0 0.0
    %665 = vmatpush1.msra.mxu0 %v614
    %666 = vmatprep.subr.mxu0 0.0
    %667 = vmatpush2.msra.mxu0 0.0
    %668 = vmatprep.subr.mxu0 0.0
    %669 = vmatpush2.msra.mxu0 0.0
    %670 = vmatprep.subr.mxu0 0.0
    %671 = vmatpush2.msra.mxu0 0.0
    %672 = vmatprep.subr.mxu0 0.0
    %673 = vmatpush2.msra.mxu0 0.0
    %674 = vmatprep.subr.mxu0 0.0
    %675 = vmatpush2.msra.mxu0 0.0
    %676 = vmatprep.subr.mxu0 0.0
    %677 = vmatpush2.msra.mxu0 0.0
    %678 = vmatprep.subr.mxu0 0.0
    %679 = vmatpush2.msra.mxu0 0.0
    %680 = vmatprep.subr.mxu0 0.0
    %681 = vmatpush2.msra.mxu0 0.0
    %682 = vmatprep.subr.mxu0 0.0
    %683 = vmatpush2.msra.mxu0 0.0
    %684 = vmatprep.subr.mxu0 0.0
    %685 = vmatpush2.msra.mxu0 0.0
    %686 = vmatprep.subr.mxu0 0.0
    %687 = vmatpush2.msra.mxu0 0.0
    %688 = vmatprep.subr.mxu0 0.0
    %689 = vmatpush2.msra.mxu0 0.0
    %690 = vmatprep.subr.mxu0 0.0
    %691 = vmatpush2.msra.mxu0 0.0
    %692 = vmatprep.subr.mxu0 0.0
    %693 = vmatpush2.msra.mxu0 0.0
    %694 = vmatprep.subr.mxu0 0.0
    %695 = vmatpush2.msra.mxu0 0.0
    %696 = vmatprep.subr.mxu0 0.0
    %697 = vmatpush2.msra.mxu0 0.0
    %698 = vmatprep.mubr.f32.mxu0 0.0
    %699 = vmatmul.mubr.f32.gmra.mxu0 %v623
    %v700 = vpop.f32.mrf.mxu0
    %v701 = vadd.f32 0.0, %v700
    %v702 = vpop.f32.mrf.mxu0
    %703 = vmatprep.mubr.f32.mxu0 0.0
    %704 = vmatmul.mubr.f32.gmra.mxu0 %v626
    %v705 = vpop.f32.mrf.mxu0
    %v706 = vadd.f32 0.0, %v705
    %v707 = vpop.f32.mrf.mxu0
    %708 = vmatprep.mubr.f32.mxu0 0.0
    %709 = vmatmul.mubr.f32.gmra.mxu0 %v629
    %v710 = vpop.f32.mrf.mxu0
    %v711 = vadd.f32 0.0, %v710
    %v712 = vpop.f32.mrf.mxu0
    %713 = vmatprep.mubr.f32.mxu0 0.0
    %714 = vmatmul.mubr.f32.gmra.mxu0 %v632
    %v715 = vpop.f32.mrf.mxu0
    %v716 = vadd.f32 0.0, %v715
    %v717 = vpop.f32.mrf.mxu0
    %718 = vdwg.mxu0
    %v719 = vadd.f32 %v493, %v701
    %v720 = vadd.f32 %v498, %v706
    %v721 = vadd.f32 %v503, %v711
    %v722 = vadd.f32 %v508, %v716
    %v723 = vld [vmem:[%s5] sm:$0x1]
    %v725 = vlaneseq
    %v726 = vshrl.u32 %v725, 7
    %v727 = vsub.s32 0, %v726
    %v728 = vrot.slane %v723, %v727
    %v730 = vadd.f32 %v719, %v728
    %v731 = vadd.f32 %v720, %v728
    %v732 = vadd.f32 %v721, %v728
    %v733 = vadd.f32 %v722, %v728
    %v734 = vmax.f32 %v730, 0.0
    %v735 = vmax.f32 %v731, 0.0
    %v736 = vmax.f32 %v732, 0.0
    %v737 = vmax.f32 %v733, 0.0
    %v738 = vld [vmem:[#allocation5] sm:$0xff]
    %v739 = vld [vmem:[#allocation5 + $0x8] sm:$0xff]
    %v740 = vld [vmem:[#allocation5 + $0x10] sm:$0xff]
    %v741 = vld [vmem:[#allocation5 + $0x18] sm:$0xff]
    %v742 = vld [vmem:[#allocation5 + $0x20] sm:$0xff]
    %v743 = vld [vmem:[#allocation5 + $0x28] sm:$0xff]
    %v744 = vld [vmem:[#allocation5 + $0x30] sm:$0xff]
    %v745 = vld [vmem:[#allocation5 + $0x38] sm:$0xff]
    %v746 = vld [vmem:[%s7] sm:$0xff]
    %v747 = vld [vmem:[%s7 + $0x8] sm:$0xff]
    %v748 = vld [vmem:[%s7 + $0x10] sm:$0xff]
    %v749 = vld [vmem:[%s7 + $0x18] sm:$0xff]
    %v750 = vld [vmem:[%s7 + $0x20] sm:$0xff]
    %v751 = vld [vmem:[%s7 + $0x28] sm:$0xff]
    %v752 = vld [vmem:[%s7 + $0x30] sm:$0xff]
    %v753 = vld [vmem:[%s7 + $0x38] sm:$0xff]
    %v754 = vld [vmem:[%s7 + $0x40] sm:$0xff]
    %v755 = vld [vmem:[%s7 + $0x48] sm:$0xff]
    %v756 = vld [vmem:[%s7 + $0x50] sm:$0xff]
    %v757 = vld [vmem:[%s7 + $0x58] sm:$0xff]
    %v758 = vld [vmem:[%s7 + $0x60] sm:$0xff]
    %v759 = vld [vmem:[%s7 + $0x68] sm:$0xff]
    %v760 = vld [vmem:[%s7 + $0x70] sm:$0xff]
    %v761 = vld [vmem:[%s7 + $0x78] sm:$0xff]
    %v762 = vld [vmem:[%s7 + $0x80] sm:$0xff]
    %v763 = vld [vmem:[%s7 + $0x88] sm:$0xff]
    %v764 = vld [vmem:[%s7 + $0x90] sm:$0xff]
    %v765 = vld [vmem:[%s7 + $0x98] sm:$0xff]
    %v766 = vld [vmem:[%s7 + $0xa0] sm:$0xff]
    %v767 = vld [vmem:[%s7 + $0xa8] sm:$0xff]
    %v768 = vld [vmem:[%s7 + $0xb0] sm:$0xff]
    %v769 = vld [vmem:[%s7 + $0xb8] sm:$0xff]
    %v770 = vld [vmem:[%s7 + $0xc0] sm:$0xff]
    %v771 = vld [vmem:[%s7 + $0xc8] sm:$0xff]
    %v772 = vld [vmem:[%s7 + $0xd0] sm:$0xff]
    %v773 = vld [vmem:[%s7 + $0xd8] sm:$0xff]
    %v774 = vld [vmem:[%s7 + $0xe0] sm:$0xff]
    %v775 = vld [vmem:[%s7 + $0xe8] sm:$0xff]
    %v776 = vld [vmem:[%s7 + $0xf0] sm:$0xff]
    %v777 = vld [vmem:[%s7 + $0xf8] sm:$0xff]
    %778 = vmatprep.subr.mxu0 0.0
    %779 = vmatpush1.msra.mxu0 %v761
    %780 = vmatprep.subr.mxu0 0.0
    %781 = vmatpush1.msra.mxu0 %v760
    %782 = vmatprep.subr.mxu0 0.0
    %783 = vmatpush1.msra.mxu0 %v759
    %784 = vmatprep.subr.mxu0 0.0
    %785 = vmatpush1.msra.mxu0 %v758
    %786 = vmatprep.subr.mxu0 0.0
    %787 = vmatpush1.msra.mxu0 %v757
    %788 = vmatprep.subr.mxu0 0.0
    %789 = vmatpush1.msra.mxu0 %v756
    %790 = vmatprep.subr.mxu0 0.0
    %791 = vmatpush1.msra.mxu0 %v755
    %792 = vmatprep.subr.mxu0 0.0
    %793 = vmatpush1.msra.mxu0 %v754
    %794 = vmatprep.subr.mxu0 0.0
    %795 = vmatpush1.msra.mxu0 %v753
    %796 = vmatprep.subr.mxu0 0.0
    %797 = vmatpush1.msra.mxu0 %v752
    %798 = vmatprep.subr.mxu0 0.0
    %799 = vmatpush1.msra.mxu0 %v751
    %800 = vmatprep.subr.mxu0 0.0
    %801 = vmatpush1.msra.mxu0 %v750
    %802 = vmatprep.subr.mxu0 0.0
    %803 = vmatpush1.msra.mxu0 %v749
    %804 = vmatprep.subr.mxu0 0.0
    %805 = vmatpush1.msra.mxu0 %v748
    %806 = vmatprep.subr.mxu0 0.0
    %807 = vmatpush1.msra.mxu0 %v747
    %808 = vmatprep.subr.mxu0 0.0
    %809 = vmatpush1.msra.mxu0 %v746
    %810 = vmatprep.subr.mxu0 0.0
    %811 = vmatpush2.msra.mxu0 %v777
    %812 = vmatprep.subr.mxu0 0.0
    %813 = vmatpush2.msra.mxu0 %v776
    %814 = vmatprep.subr.mxu0 0.0
    %815 = vmatpush2.msra.mxu0 %v775
    %816 = vmatprep.subr.mxu0 0.0
    %817 = vmatpush2.msra.mxu0 %v774
    %818 = vmatprep.subr.mxu0 0.0
    %819 = vmatpush2.msra.mxu0 %v773
    %820 = vmatprep.subr.mxu0 0.0
    %821 = vmatpush2.msra.mxu0 %v772
    %822 = vmatprep.subr.mxu0 0.0
    %823 = vmatpush2.msra.mxu0 %v771
    %824 = vmatprep.subr.mxu0 0.0
    %825 = vmatpush2.msra.mxu0 %v770
    %826 = vmatprep.subr.mxu0 0.0
    %827 = vmatpush2.msra.mxu0 %v769
    %828 = vmatprep.subr.mxu0 0.0
    %829 = vmatpush2.msra.mxu0 %v768
    %830 = vmatprep.subr.mxu0 0.0
    %831 = vmatpush2.msra.mxu0 %v767
    %832 = vmatprep.subr.mxu0 0.0
    %833 = vmatpush2.msra.mxu0 %v766
    %834 = vmatprep.subr.mxu0 0.0
    %835 = vmatpush2.msra.mxu0 %v765
    %836 = vmatprep.subr.mxu0 0.0
    %837 = vmatpush2.msra.mxu0 %v764
    %838 = vmatprep.subr.mxu0 0.0
    %839 = vmatpush2.msra.mxu0 %v763
    %840 = vmatprep.subr.mxu0 0.0
    %841 = vmatpush2.msra.mxu0 %v762
    %842 = vmatprep.mubr.f32.mxu0 %v62
    %843 = vmatmul.mubr.f32.gmra.mxu0 %v61
    %v844 = vpop.f32.mrf.mxu0
    %v845 = vadd.f32 0.0, %v844
    %v846 = vpop.f32.mrf.mxu0
    %847 = vmatprep.mubr.f32.mxu0 %v64
    %848 = vmatmul.mubr.f32.gmra.mxu0 %v63
    %v849 = vpop.f32.mrf.mxu0
    %v850 = vadd.f32 0.0, %v849
    %v851 = vpop.f32.mrf.mxu0
    %852 = vmatprep.mubr.f32.mxu0 %v66
    %853 = vmatmul.mubr.f32.gmra.mxu0 %v65
    %v854 = vpop.f32.mrf.mxu0
    %v855 = vadd.f32 0.0, %v854
    %v856 = vpop.f32.mrf.mxu0
    %857 = vmatprep.mubr.f32.mxu0 %v68
    %858 = vmatmul.mubr.f32.gmra.mxu0 %v67
    %v859 = vpop.f32.mrf.mxu0
    %v860 = vadd.f32 0.0, %v859
    %v861 = vpop.f32.mrf.mxu0
    %862 = vdwg.mxu0
    %v864 = vsel %vm316, %v734, 0
    %v867 = vsel %vm316, %v735, 0
    %v870 = vsel %vm316, %v736, 0
    %v873 = vsel %vm316, %v737, 0
    %875 = vmatprep.subr.mxu0 0.0
    %876 = vmatpush1.msra.mxu0 0.0
    %877 = vmatprep.subr.mxu0 0.0
    %878 = vmatpush1.msra.mxu0 0.0
    %879 = vmatprep.subr.mxu0 0.0
    %880 = vmatpush1.msra.mxu0 0.0
    %881 = vmatprep.subr.mxu0 0.0
    %882 = vmatpush1.msra.mxu0 0.0
    %883 = vmatprep.subr.mxu0 0.0
    %884 = vmatpush1.msra.mxu0 0.0
    %885 = vmatprep.subr.mxu0 0.0
    %886 = vmatpush1.msra.mxu0 0.0
    %887 = vmatprep.subr.mxu0 0.0
    %888 = vmatpush1.msra.mxu0 0.0
    %889 = vmatprep.subr.mxu0 0.0
    %890 = vmatpush1.msra.mxu0 0.0
    %891 = vmatprep.subr.mxu0 0.0
    %892 = vmatpush1.msra.mxu0 %v745
    %893 = vmatprep.subr.mxu0 0.0
    %894 = vmatpush1.msra.mxu0 %v744
    %895 = vmatprep.subr.mxu0 0.0
    %896 = vmatpush1.msra.mxu0 %v743
    %897 = vmatprep.subr.mxu0 0.0
    %898 = vmatpush1.msra.mxu0 %v742
    %899 = vmatprep.subr.mxu0 0.0
    %900 = vmatpush1.msra.mxu0 %v741
    %901 = vmatprep.subr.mxu0 0.0
    %902 = vmatpush1.msra.mxu0 %v740
    %903 = vmatprep.subr.mxu0 0.0
    %904 = vmatpush1.msra.mxu0 %v739
    %905 = vmatprep.subr.mxu0 0.0
    %906 = vmatpush1.msra.mxu0 %v738
    %907 = vmatprep.subr.mxu0 0.0
    %908 = vmatpush2.msra.mxu0 0.0
    %909 = vmatprep.subr.mxu0 0.0
    %910 = vmatpush2.msra.mxu0 0.0
    %911 = vmatprep.subr.mxu0 0.0
    %912 = vmatpush2.msra.mxu0 0.0
    %913 = vmatprep.subr.mxu0 0.0
    %914 = vmatpush2.msra.mxu0 0.0
    %915 = vmatprep.subr.mxu0 0.0
    %916 = vmatpush2.msra.mxu0 0.0
    %917 = vmatprep.subr.mxu0 0.0
    %918 = vmatpush2.msra.mxu0 0.0
    %919 = vmatprep.subr.mxu0 0.0
    %920 = vmatpush2.msra.mxu0 0.0
    %921 = vmatprep.subr.mxu0 0.0
    %922 = vmatpush2.msra.mxu0 0.0
    %923 = vmatprep.subr.mxu0 0.0
    %924 = vmatpush2.msra.mxu0 0.0
    %925 = vmatprep.subr.mxu0 0.0
    %926 = vmatpush2.msra.mxu0 0.0
    %927 = vmatprep.subr.mxu0 0.0
    %928 = vmatpush2.msra.mxu0 0.0
    %929 = vmatprep.subr.mxu0 0.0
    %930 = vmatpush2.msra.mxu0 0.0
    %931 = vmatprep.subr.mxu0 0.0
    %932 = vmatpush2.msra.mxu0 0.0
    %933 = vmatprep.subr.mxu0 0.0
    %934 = vmatpush2.msra.mxu0 0.0
    %935 = vmatprep.subr.mxu0 0.0
    %936 = vmatpush2.msra.mxu0 0.0
    %937 = vmatprep.subr.mxu0 0.0
    %938 = vmatpush2.msra.mxu0 0.0
    %939 = vmatprep.mubr.f32.mxu0 0.0
    %940 = vmatmul.mubr.f32.gmra.mxu0 %v864
    %v941 = vpop.f32.mrf.mxu0
    %v942 = vadd.f32 %v845, %v941
    %v943 = vpop.f32.mrf.mxu0
    %944 = vmatprep.mubr.f32.mxu0 0.0
    %945 = vmatmul.mubr.f32.gmra.mxu0 %v867
    %v946 = vpop.f32.mrf.mxu0
    %v947 = vadd.f32 %v850, %v946
    %v948 = vpop.f32.mrf.mxu0
    %949 = vmatprep.mubr.f32.mxu0 0.0
    %950 = vmatmul.mubr.f32.gmra.mxu0 %v870
    %v951 = vpop.f32.mrf.mxu0
    %v952 = vadd.f32 %v855, %v951
    %v953 = vpop.f32.mrf.mxu0
    %954 = vmatprep.mubr.f32.mxu0 0.0
    %955 = vmatmul.mubr.f32.gmra.mxu0 %v873
    %v956 = vpop.f32.mrf.mxu0
    %v957 = vadd.f32 %v860, %v956
    %v958 = vpop.f32.mrf.mxu0
    %959 = vdwg.mxu0
    %v960 = vld [vmem:[%s8] sm:$0x1]
    %v962 = vlaneseq
    %v963 = vshrl.u32 %v962, 7
    %v964 = vsub.s32 0, %v963
    %v965 = vrot.slane %v960, %v964
    %v967 = vadd.f32 %v942, %v965
    %v968 = vadd.f32 %v947, %v965
    %v969 = vadd.f32 %v952, %v965
    %v970 = vadd.f32 %v957, %v965
    %v971 = vmax.f32 %v967, 0.0
    %v972 = vmax.f32 %v968, 0.0
    %v973 = vmax.f32 %v969, 0.0
    %v974 = vmax.f32 %v970, 0.0
    %975 = vst [vmem:[#allocation7] sm:$0xff] %v971
    %976 = vst [vmem:[#allocation7 + $0x8] sm:$0xff] %v972
    %977 = vst [vmem:[#allocation7 + $0x10] sm:$0xff] %v973
    %978 = vst [vmem:[#allocation7 + $0x18] sm:$0xff] %v974
    // Predicated region
    $region46: #{tpu_custom_call.1} parent=1 // pred_check
      _
    $region47: #{tpu_custom_call.1} parent=1 // pred_check_branch
      %980 = sbr.rel (0) target = $region49
    $region48: #{tpu_custom_call.1} parent=1 // pred_region
      %s982 = ssub.s32 512, 512
      %983 = vsyncadd [#allocation4], %s982
      %s984 = sshll.u32 [#allocation7], 4
      %s985 = int_to_ptr.vmem [resolvable:$true] %s984
      %990 = dma.vmem_to_hbm [thread:$0]  %s985, 512, %s9, [#allocation4], 128, 128, 8
    $region49: #{tpu_custom_call.1} parent=1 // pred_fallthru
      _
    // Predicated region
    $region50: #{tpu_custom_call.1} parent=1 // pred_check
      _
    $region51: #{tpu_custom_call.1} parent=1 // pred_check_branch
      %992 = sbr.rel (0) target = $region53
    $region52: #{tpu_custom_call.1} parent=1 // pred_region
      %993 = dma.done [#allocation4], 512
    $region53: #{tpu_custom_call.1} parent=1 // pred_fallthru
      _
    %994 = vsyncpa [#allocation3], 1
    %995 = vsyncpa [#allocation6], 1
    %996 = vsyncpa [#allocation4], 1

</llo_original>
